<compile_context>
chip_gen: v5e
topology: v5e:2x2
jax: 0.10.0
libtpu: 0.0.40
codegen_flags: <defaults>
</compile_context>

<pallas_src>
import functools

import jax
import jax.numpy as jnp
from jax.experimental import pallas as pl
from jax.experimental.pallas import tpu as pltpu


def _round_up(x, m):
    return ((x + m - 1) // m) * m


def _gelu_tanh(x):
    # tanh-approximate GELU: the transcendental goes to the EUP slot and is
    # hidden under the MXU work, unlike the exact-erf VALU polynomial.
    c = 0.7978845608028654  # sqrt(2/pi)
    return 0.5 * x * (1.0 + jnp.tanh(c * (x + 0.044715 * x * x * x)))


def _gelu_exact(x):
    # PyTorch nn.GELU() default (erf). Used only by the f32 precision check.
    return 0.5 * x * (1.0 + jax.lax.erf(x * (1.0 / jnp.sqrt(2.0).astype(x.dtype))))


def mlp_residual_kernel(x_ref, w0_ref, b0_ref, w1_ref, b1_ref, w2_ref, b2_ref,
                        o_ref):
    """Fused 3-layer MLP + residual on one [TM, Hp] row-tile.

    Matmuls: bf16 operands, f32 accumulation (MXU). Epilogue + residual in f32.
    """
    h = jnp.dot(x_ref[...].astype(jnp.bfloat16), w0_ref[...],
                preferred_element_type=jnp.float32) + b0_ref[...]
    h = _gelu_tanh(h)

    h = jnp.dot(h.astype(jnp.bfloat16), w1_ref[...],
                preferred_element_type=jnp.float32) + b1_ref[...]
    h = _gelu_tanh(h)

    h = jnp.dot(h.astype(jnp.bfloat16), w2_ref[...],
                preferred_element_type=jnp.float32) + b2_ref[...]
    h = jnp.maximum(h, 0.0)  # ReLU

    # Residual: re-read x here (instead of holding an f32 copy across the
    # whole body) to keep live VMEM/vregs low.
    o_ref[...] = (x_ref[...].astype(jnp.float32) + h).astype(o_ref.dtype)


def _tpu_vmem_capacity_bytes():
    try:
        return int(pltpu.get_tpu_info().vmem_capacity_bytes)
    except Exception:
        return 128 << 20  # conservative default (v5e/v6e)


def _default_tm():
    # v7x: 64 MiB/TC -> smaller row tiles; v5e/v6e: 128 MiB -> 512-row tiles
    # (better per-step amortization, ~85% of HBM roofline per measured data).
    return 256 if _tpu_vmem_capacity_bytes() <= (64 << 20) else 512


def _vmem_limit_bytes(Hp, tm, io_itemsize):
    cap = _tpu_vmem_capacity_bytes()
    budget_cap = int(cap * 0.75)               # ~48 MiB on v7x, ~96 MiB on v5e/v6e
    weights = 3 * Hp * Hp * 2                  # bf16 weights, single-buffered
    biases = 3 * Hp * 4                        # f32 biases (tiny)
    io_tiles = 2 * (tm * Hp * io_itemsize) * 2  # x + out row tiles, double-buffered
    scratch = 4 * tm * Hp * 4                  # f32 activation intermediates headroom
    est = int((weights + biases + io_tiles + scratch) * 1.25) + (2 << 20)
    return max(8 << 20, min(est, budget_cap))


@functools.partial(jax.jit, static_argnames=("tm",))
def mlp_layer_forward(features, params, *, tm=None):
    """features: [..., H]; params: dict with w0,b0,w1,b1,w2,b2 (w: [H,H], b: [1,H])."""
    if tm is None:
        tm = _default_tm()

    orig_shape = features.shape
    H = orig_shape[-1]
    x2d = features.reshape(-1, H)
    N = x2d.shape[0]

    # Pad the lane dim up to a multiple of 128 (production H=768/1024 are
    # already aligned; this keeps the toy / odd-H path on the fast layout).
    Hp = max(128, _round_up(H, 128))

    # Row tile: clip for tiny inputs (multiple of 8 sublanes) and guarantee
    # at least 2 grid steps when possible so v7x's second TensorCore is used.
    if N <= tm:
        tm_eff = _round_up(max(pl.cdiv(N, 2), 1), 8) if N > 8 else _round_up(N, 8)
    else:
        tm_eff = tm

    pad_rows = (-N) % tm_eff
    pad_cols = Hp - H
    if pad_rows or pad_cols:
        x2d = jnp.pad(x2d, ((0, pad_rows), (0, pad_cols)))
    Np = x2d.shape[0]

    # bf16 weights for the MXU; f32 biases for the f32 epilogue.  Zero-pad to
    # Hp (exact: padded rows/cols contribute 0, GELU(0)=ReLU(0)=0).
    def pad_w(w):
        return jnp.pad(w.astype(jnp.bfloat16), ((0, pad_cols), (0, pad_cols)))

    def pad_b(b):
        return jnp.pad(b.astype(jnp.float32), ((0, 0), (0, pad_cols)))

    w0, w1, w2 = pad_w(params["w0"]), pad_w(params["w1"]), pad_w(params["w2"])
    b0, b1, b2 = pad_b(params["b0"]), pad_b(params["b1"]), pad_b(params["b2"])

    # Constant-index (resident) weights/biases: single-buffer them — nothing
    # to prefetch after the first DMA, and it halves resident-weight VMEM.
    full_w_spec = pl.BlockSpec((Hp, Hp), lambda i: (0, 0),
                               pipeline_mode=pl.Buffered(1))
    full_b_spec = pl.BlockSpec((1, Hp), lambda i: (0, 0),
                               pipeline_mode=pl.Buffered(1))

    io_itemsize = jnp.dtype(features.dtype).itemsize
    cost = pl.CostEstimate(
        flops=3 * 2 * Np * Hp * Hp,
        transcendentals=2 * Np * Hp,            # two tanh-GELUs
        bytes_accessed=2 * Np * Hp * io_itemsize + 3 * Hp * Hp * 2 + 3 * Hp * 4,
    )

    out = pl.pallas_call(
        mlp_residual_kernel,
        out_shape=jax.ShapeDtypeStruct((Np, Hp), features.dtype),
        grid_spec=pltpu.PrefetchScalarGridSpec(
            num_scalar_prefetch=0,
            grid=(Np // tm_eff,),
            in_specs=[
                pl.BlockSpec((tm_eff, Hp), lambda i: (i, 0)),  # x row tile
                full_w_spec, full_b_spec,                      # layer 0
                full_w_spec, full_b_spec,                      # layer 1
                full_w_spec, full_b_spec,                      # layer 2
            ],
            out_specs=pl.BlockSpec((tm_eff, Hp), lambda i: (i, 0)),
        ),
        compiler_params=pltpu.CompilerParams(
            dimension_semantics=("parallel",),
            vmem_limit_bytes=_vmem_limit_bytes(Hp, tm_eff, io_itemsize),
        ),
        cost_estimate=cost,
    )(x2d, w0, b0, w1, b1, w2, b2)

    if pad_rows or pad_cols:
        out = out[:N, :H]
    return out.reshape(orig_shape)


def init_params(key, hidden_size, dtype=jnp.float32):
    """Deterministic synthetic init (uniform like torch.nn.Linear's default bound)."""
    keys = jax.random.split(key, 6)
    bound = 1.0 / jnp.sqrt(hidden_size)
    def u(k, shape):
        return jax.random.uniform(k, shape, dtype=dtype, minval=-bound, maxval=bound)
    return {
        "w0": u(keys[0], (hidden_size, hidden_size)),
        "b0": u(keys[1], (1, hidden_size)),
        "w1": u(keys[2], (hidden_size, hidden_size)),
        "b1": u(keys[3], (1, hidden_size)),
        "w2": u(keys[4], (hidden_size, hidden_size)),
        "b2": u(keys[5], (1, hidden_size)),
    }


def mlp_layer_ref_same_path(features, params):
    """Pure-JAX reference mirroring the kernel's arithmetic path
    (bf16 MXU operands, f32 accumulation, tanh GELU, f32 residual)."""
    w0 = params["w0"].astype(jnp.bfloat16)
    w1 = params["w1"].astype(jnp.bfloat16)
    w2 = params["w2"].astype(jnp.bfloat16)
    b0 = params["b0"].astype(jnp.float32)
    b1 = params["b1"].astype(jnp.float32)
    b2 = params["b2"].astype(jnp.float32)

    h = jnp.dot(features.astype(jnp.bfloat16), w0,
                preferred_element_type=jnp.float32) + b0
    h = _gelu_tanh(h)
    h = jnp.dot(h.astype(jnp.bfloat16), w1,
                preferred_element_type=jnp.float32) + b1
    h = _gelu_tanh(h)
    h = jnp.dot(h.astype(jnp.bfloat16), w2,
                preferred_element_type=jnp.float32) + b2
    h = jnp.maximum(h, 0.0)
    return features + h.astype(features.dtype)


def mlp_layer_ref_f32_exact(features, params):
    """Full-f32, exact-erf GELU reference (the PyTorch formulation) to
    quantify the accepted bf16 / tanh-GELU precision trade."""
    x = features.astype(jnp.float32)
    h = x @ params["w0"].astype(jnp.float32) + params["b0"].astype(jnp.float32)
    h = _gelu_exact(h)
    h = h @ params["w1"].astype(jnp.float32) + params["b1"].astype(jnp.float32)
    h = _gelu_exact(h)
    h = h @ params["w2"].astype(jnp.float32) + params["b2"].astype(jnp.float32)
    h = jnp.maximum(h, 0.0)
    return (x + h).astype(features.dtype)


if __name__ == "__main__":
    key = jax.random.PRNGKey(0)
    k_x, k_p = jax.random.split(key)

    batch, seq, hidden = 2, 8, 32
    features = jax.random.normal(k_x, (batch, seq, hidden), dtype=jnp.float32)
    params = init_params(k_p, hidden)

    out = mlp_layer_forward(features, params)
    out = jax.block_until_ready(out)
    assert out.shape == features.shape

    # Tight check vs a reference on the same arithmetic path (bf16 MXU,
    # tanh GELU, f32 accumulation/residual).
    ref_same = mlp_layer_ref_same_path(features, params)
    assert jnp.allclose(out, ref_same, atol=2e-3, rtol=2e-3), \
        "mismatch vs same-path reference"

    # Loose check vs the exact-f32 PyTorch formulation to quantify the
    # intentional bf16-operand / tanh-GELU precision trade.
    ref_f32 = mlp_layer_ref_f32_exact(features, params)
    assert jnp.allclose(out, ref_f32, atol=6e-2, rtol=6e-2), \
        "mismatch vs exact f32 reference beyond accepted precision trade"

    print("KERNEL_OK")
</pallas_src>

<mosaic_0001>
module attributes {stable_mosaic.version = 11 : i64} {
  func.func @mlp_residual_kernel(%arg0: i32, %arg1: memref<8x128xf32, #tpu.memory_space<vmem>>, %arg2: memref<128x128xbf16, #tpu.memory_space<vmem>>, %arg3: memref<1x128xf32, #tpu.memory_space<vmem>>, %arg4: memref<128x128xbf16, #tpu.memory_space<vmem>>, %arg5: memref<1x128xf32, #tpu.memory_space<vmem>>, %arg6: memref<128x128xbf16, #tpu.memory_space<vmem>>, %arg7: memref<1x128xf32, #tpu.memory_space<vmem>>, %arg8: memref<8x128xf32, #tpu.memory_space<vmem>>) attributes {dimension_semantics = [#tpu.dimension_semantics<parallel>], iteration_bounds = array<i64: 2>, scalar_prefetch = 0 : i64, scratch_operands = 0 : i64, tpu.core_type = #tpu.core_type<tc>, window_params = [{transform_indices = @transform_0, window_bounds = array<i64: 8, 128>}, {pipeline_mode = #tpu.pipeline_mode<synchronous>, transform_indices = @transform_1, window_bounds = array<i64: 128, 128>}, {pipeline_mode = #tpu.pipeline_mode<synchronous>, transform_indices = @transform_2, window_bounds = array<i64: 1, 128>}, {pipeline_mode = #tpu.pipeline_mode<synchronous>, transform_indices = @transform_3, window_bounds = array<i64: 128, 128>}, {pipeline_mode = #tpu.pipeline_mode<synchronous>, transform_indices = @transform_4, window_bounds = array<i64: 1, 128>}, {pipeline_mode = #tpu.pipeline_mode<synchronous>, transform_indices = @transform_5, window_bounds = array<i64: 128, 128>}, {pipeline_mode = #tpu.pipeline_mode<synchronous>, transform_indices = @transform_6, window_bounds = array<i64: 1, 128>}, {transform_indices = @transform_7, window_bounds = array<i64: 8, 128>}]} {
    %c0 = arith.constant 0 : index
    %c0_0 = arith.constant 0 : index
    %0 = vector.load %arg1[%c0, %c0_0] : memref<8x128xf32, #tpu.memory_space<vmem>>, vector<8x128xf32>
    %1 = arith.truncf %0 : vector<8x128xf32> to vector<8x128xbf16>
    %c0_1 = arith.constant 0 : index
    %c0_2 = arith.constant 0 : index
    %2 = vector.load %arg2[%c0_1, %c0_2] : memref<128x128xbf16, #tpu.memory_space<vmem>>, vector<128x128xbf16>
    %cst = arith.constant dense<0.000000e+00> : vector<8x128xf32>
    %3 = tpu.matmul %1, %2, %cst {dimension_numbers = #tpu.dot_dimension_numbers<[1], [0], [0], [1], [0, 0, 1, 1], [], []>} : vector<8x128xbf16>, vector<128x128xbf16>, vector<8x128xf32> -> vector<8x128xf32>
    %c0_3 = arith.constant 0 : index
    %c0_4 = arith.constant 0 : index
    %4 = vector.load %arg3[%c0_3, %c0_4] : memref<1x128xf32, #tpu.memory_space<vmem>>, vector<1x128xf32>
    %5 = vector.broadcast %4 : vector<1x128xf32> to vector<8x128xf32>
    %6 = arith.addf %3, %5 : vector<8x128xf32>
    %cst_5 = arith.constant 5.000000e-01 : f32
    %7 = vector.broadcast %cst_5 : f32 to vector<8x128xf32>
    %8 = arith.mulf %7, %6 : vector<8x128xf32>
    %cst_6 = arith.constant 4.471500e-02 : f32
    %9 = vector.broadcast %cst_6 : f32 to vector<8x128xf32>
    %10 = arith.mulf %9, %6 : vector<8x128xf32>
    %11 = arith.mulf %10, %6 : vector<8x128xf32>
    %12 = arith.mulf %11, %6 : vector<8x128xf32>
    %13 = arith.addf %6, %12 : vector<8x128xf32>
    %cst_7 = arith.constant 0.797884583 : f32
    %14 = vector.broadcast %cst_7 : f32 to vector<8x128xf32>
    %15 = arith.mulf %14, %13 : vector<8x128xf32>
    %16 = math.tanh %15 : vector<8x128xf32>
    %cst_8 = arith.constant 1.000000e+00 : f32
    %17 = vector.broadcast %cst_8 : f32 to vector<8x128xf32>
    %18 = arith.addf %17, %16 : vector<8x128xf32>
    %19 = arith.mulf %8, %18 : vector<8x128xf32>
    %20 = arith.truncf %19 : vector<8x128xf32> to vector<8x128xbf16>
    %c0_9 = arith.constant 0 : index
    %c0_10 = arith.constant 0 : index
    %21 = vector.load %arg4[%c0_9, %c0_10] : memref<128x128xbf16, #tpu.memory_space<vmem>>, vector<128x128xbf16>
    %cst_11 = arith.constant dense<0.000000e+00> : vector<8x128xf32>
    %22 = tpu.matmul %20, %21, %cst_11 {dimension_numbers = #tpu.dot_dimension_numbers<[1], [0], [0], [1], [0, 0, 1, 1], [], []>} : vector<8x128xbf16>, vector<128x128xbf16>, vector<8x128xf32> -> vector<8x128xf32>
    %c0_12 = arith.constant 0 : index
    %c0_13 = arith.constant 0 : index
    %23 = vector.load %arg5[%c0_12, %c0_13] : memref<1x128xf32, #tpu.memory_space<vmem>>, vector<1x128xf32>
    %24 = vector.broadcast %23 : vector<1x128xf32> to vector<8x128xf32>
    %25 = arith.addf %22, %24 : vector<8x128xf32>
    %cst_14 = arith.constant 5.000000e-01 : f32
    %26 = vector.broadcast %cst_14 : f32 to vector<8x128xf32>
    %27 = arith.mulf %26, %25 : vector<8x128xf32>
    %cst_15 = arith.constant 4.471500e-02 : f32
    %28 = vector.broadcast %cst_15 : f32 to vector<8x128xf32>
    %29 = arith.mulf %28, %25 : vector<8x128xf32>
    %30 = arith.mulf %29, %25 : vector<8x128xf32>
    %31 = arith.mulf %30, %25 : vector<8x128xf32>
    %32 = arith.addf %25, %31 : vector<8x128xf32>
    %cst_16 = arith.constant 0.797884583 : f32
    %33 = vector.broadcast %cst_16 : f32 to vector<8x128xf32>
    %34 = arith.mulf %33, %32 : vector<8x128xf32>
    %35 = math.tanh %34 : vector<8x128xf32>
    %cst_17 = arith.constant 1.000000e+00 : f32
    %36 = vector.broadcast %cst_17 : f32 to vector<8x128xf32>
    %37 = arith.addf %36, %35 : vector<8x128xf32>
    %38 = arith.mulf %27, %37 : vector<8x128xf32>
    %39 = arith.truncf %38 : vector<8x128xf32> to vector<8x128xbf16>
    %c0_18 = arith.constant 0 : index
    %c0_19 = arith.constant 0 : index
    %40 = vector.load %arg6[%c0_18, %c0_19] : memref<128x128xbf16, #tpu.memory_space<vmem>>, vector<128x128xbf16>
    %cst_20 = arith.constant dense<0.000000e+00> : vector<8x128xf32>
    %41 = tpu.matmul %39, %40, %cst_20 {dimension_numbers = #tpu.dot_dimension_numbers<[1], [0], [0], [1], [0, 0, 1, 1], [], []>} : vector<8x128xbf16>, vector<128x128xbf16>, vector<8x128xf32> -> vector<8x128xf32>
    %c0_21 = arith.constant 0 : index
    %c0_22 = arith.constant 0 : index
    %42 = vector.load %arg7[%c0_21, %c0_22] : memref<1x128xf32, #tpu.memory_space<vmem>>, vector<1x128xf32>
    %43 = vector.broadcast %42 : vector<1x128xf32> to vector<8x128xf32>
    %44 = arith.addf %41, %43 : vector<8x128xf32>
    %cst_23 = arith.constant 0.000000e+00 : f32
    %45 = vector.broadcast %cst_23 : f32 to vector<8x128xf32>
    %46 = arith.maximumf %44, %45 : vector<8x128xf32>
    %c0_24 = arith.constant 0 : index
    %c0_25 = arith.constant 0 : index
    %47 = vector.load %arg1[%c0_24, %c0_25] : memref<8x128xf32, #tpu.memory_space<vmem>>, vector<8x128xf32>
    %48 = arith.addf %47, %46 : vector<8x128xf32>
    %c0_26 = arith.constant 0 : index
    %c0_27 = arith.constant 0 : index
    %49 = vector.load %arg8[%c0_26, %c0_27] : memref<8x128xf32, #tpu.memory_space<vmem>>, vector<8x128xf32>
    tpu.vector_store %arg8[%c0_26, %c0_27], %48 {strides = array<i32>} : memref<8x128xf32, #tpu.memory_space<vmem>>, vector<8x128xf32>,
    return
  }
  func.func @transform_0(%arg0: i32) -> (i32, i32) {
    %c0_i32 = arith.constant 0 : i32
    %c0_i32_0 = arith.constant 0 : i32
    return %arg0, %c0_i32 : i32, i32
  }
  func.func @transform_1(%arg0: i32) -> (i32, i32) {
    %c0_i32 = arith.constant 0 : i32
    %c0_i32_0 = arith.constant 0 : i32
    %c0_i32_1 = arith.constant 0 : i32
    return %c0_i32, %c0_i32_0 : i32, i32
  }
  func.func @transform_2(%arg0: i32) -> (i32, i32) {
    %c0_i32 = arith.constant 0 : i32
    %c0_i32_0 = arith.constant 0 : i32
    %c0_i32_1 = arith.constant 0 : i32
    return %c0_i32, %c0_i32_0 : i32, i32
  }
  func.func @transform_3(%arg0: i32) -> (i32, i32) {
    %c0_i32 = arith.constant 0 : i32
    %c0_i32_0 = arith.constant 0 : i32
    %c0_i32_1 = arith.constant 0 : i32
    return %c0_i32, %c0_i32_0 : i32, i32
  }
  func.func @transform_4(%arg0: i32) -> (i32, i32) {
    %c0_i32 = arith.constant 0 : i32
    %c0_i32_0 = arith.constant 0 : i32
    %c0_i32_1 = arith.constant 0 : i32
    return %c0_i32, %c0_i32_0 : i32, i32
  }
  func.func @transform_5(%arg0: i32) -> (i32, i32) {
    %c0_i32 = arith.constant 0 : i32
    %c0_i32_0 = arith.constant 0 : i32
    %c0_i32_1 = arith.constant 0 : i32
    return %c0_i32, %c0_i32_0 : i32, i32
  }
  func.func @transform_6(%arg0: i32) -> (i32, i32) {
    %c0_i32 = arith.constant 0 : i32
    %c0_i32_0 = arith.constant 0 : i32
    %c0_i32_1 = arith.constant 0 : i32
    return %c0_i32, %c0_i32_0 : i32, i32
  }
  func.func @transform_7(%arg0: i32) -> (i32, i32) {
    %c0_i32 = arith.constant 0 : i32
    %c0_i32_0 = arith.constant 0 : i32
    return %arg0, %c0_i32 : i32, i32
  }
}

</mosaic_0001>

<llo_original>
// kernel: mlp_layer_forward.1
$region0: #{mlp_layer_forward.1}
  #allocation0 [shape = 'u32[]', space=smem, size = 0x4, offset = 0x4, fixed_abs, tag = 'smem constant byte address 0x4 - core index']
  #allocation1 [shape = 'u32[72,128]{1,0:T(1,128)}', space=vmem, size = 0x9000, scoped, tag = 'internal scratch']
  %s0 = inlined_call_operand.vmem [shape: f32[16,128], index: 0, kind: input, shape index: {}]
  %s1 = inlined_call_operand.vmem [shape: bf16[128,128], index: 1, kind: input, shape index: {}]
  %s2 = inlined_call_operand.vmem [shape: f32[1,128], index: 2, kind: input, shape index: {}]
  %s3 = inlined_call_operand.vmem [shape: bf16[128,128], index: 3, kind: input, shape index: {}]
  %s4 = inlined_call_operand.vmem [shape: f32[1,128], index: 4, kind: input, shape index: {}]
  %s5 = inlined_call_operand.vmem [shape: bf16[128,128], index: 5, kind: input, shape index: {}]
  %s6 = inlined_call_operand.vmem [shape: f32[1,128], index: 6, kind: input, shape index: {}]
  %s7 = inlined_call_operand.vmem [shape: f32[16,128], index: 7, kind: output, shape index: {}]
  %s8 = sld [smem:[#allocation0]]
  $region61: #{mlp_layer_forward.1} parent=0
    _
  %s10 = ssub.s32 1, %s8
  %s11 = scalar_select 0, %s10, %s8
  loop: start=0, step=1, limit=4
  $region2: #{mlp_layer_forward.1} parent=0 // loop_pre_header
    _
  $region3: #{mlp_layer_forward.1} parent=0 // loop_header
    %s13 = sphi 0, %s17
    %p14 = scmp.ge.s32.totalorder %s13, 4
    %s23 = sphi 0, %s25
    %s26 = sphi 0, %s23
    %s27 = sphi 0, %s26
    %s43 = sphi 0, %s27
    %s47 = sphi 0, %s47
    %s49 = sphi 0, %s47
    %s50 = sphi 0, %s49
    %s64 = sphi 0, %s50
    %s68 = sphi 0, %s68
    %s70 = sphi 0, %s68
    %s71 = sphi 0, %s70
    %s85 = sphi 0, %s71
    %s89 = sphi 0, %s89
    %s91 = sphi 0, %s89
    %s92 = sphi 0, %s91
    %s106 = sphi 0, %s92
    %s110 = sphi 0, %s110
    %s112 = sphi 0, %s110
    %s113 = sphi 0, %s112
    %s127 = sphi 0, %s113
    %s131 = sphi 0, %s131
    %s133 = sphi 0, %s131
    %s134 = sphi 0, %s133
    %s148 = sphi 0, %s134
    %s152 = sphi 0, %s152
    %s154 = sphi 0, %s152
    %s155 = sphi 0, %s154
    %s169 = sphi 0, %s155
    %s175 = sphi 0, %s177
    %s178 = sphi 0, %s175
    %s179 = sphi 0, %s178
    %s195 = sphi 0, %s179
  $region4: #{mlp_layer_forward.1} parent=0 // loop_header_branch
    %16 = sbr.rel (%p14) target = $region8
  $region5: #{mlp_layer_forward.1} parent=0 // loop_body
    %s18 = ssub.s32 %s13, 1
    %s19 = ssub.s32 %s13, 2
    %s20 = sadd.s32 %s13, 1
    %s21 = ssub.s32 %s13, %s20
    %p22 = scmp.eq.s32.totalorder %s21, 0
    %s24 = sadd.s32 %s23, 1
    %s25 = scalar_select %p22, %s23, %s24
    %p28 = pneg %p22
    %p29 = scmp.eq.s32.totalorder %s13, 1
    %p30 = por %p28, %p29
    %p31 = scmp.ne.s32.totalorder %s23, %s26
    %p32 = scmp.eq.s32.totalorder %s13, 0
    %p33 = por %p31, %p32
    %p34 = scmp.ne.s32.totalorder %s23, %s26
    %p35 = scmp.eq.s32.totalorder %s18, 1
    %p36 = por %p34, %p35
    %p37 = scmp.ne.s32.totalorder %s26, %s27
    %p38 = scmp.eq.s32.totalorder %s18, 0
    %p39 = por %p37, %p38
    %p40 = scmp.ne.s32.totalorder %s26, %s27
    %p41 = scmp.eq.s32.totalorder %s19, 1
    %p42 = por %p40, %p41
    %p44 = scmp.ne.s32.totalorder %s27, %s43
    %p45 = scmp.eq.s32.totalorder %s19, 0
    %p46 = por %p44, %p45
    %s48 = sadd.s32 %s47, 1
    %p51 = scmp.eq.s32.totalorder %s13, 1
    %p52 = scmp.ne.s32.totalorder %s47, %s49
    %p53 = scmp.eq.s32.totalorder %s13, 0
    %p54 = por %p52, %p53
    %p55 = scmp.ne.s32.totalorder %s47, %s49
    %p56 = scmp.eq.s32.totalorder %s18, 1
    %p57 = por %p55, %p56
    %p58 = scmp.ne.s32.totalorder %s49, %s50
    %p59 = scmp.eq.s32.totalorder %s18, 0
    %p60 = por %p58, %p59
    %p61 = scmp.ne.s32.totalorder %s49, %s50
    %p62 = scmp.eq.s32.totalorder %s19, 1
    %p63 = por %p61, %p62
    %p65 = scmp.ne.s32.totalorder %s50, %s64
    %p66 = scmp.eq.s32.totalorder %s19, 0
    %p67 = por %p65, %p66
    %s69 = sadd.s32 %s68, 1
    %p72 = scmp.eq.s32.totalorder %s13, 1
    %p73 = scmp.ne.s32.totalorder %s68, %s70
    %p74 = scmp.eq.s32.totalorder %s13, 0
    %p75 = por %p73, %p74
    %p76 = scmp.ne.s32.totalorder %s68, %s70
    %p77 = scmp.eq.s32.totalorder %s18, 1
    %p78 = por %p76, %p77
    %p79 = scmp.ne.s32.totalorder %s70, %s71
    %p80 = scmp.eq.s32.totalorder %s18, 0
    %p81 = por %p79, %p80
    %p82 = scmp.ne.s32.totalorder %s70, %s71
    %p83 = scmp.eq.s32.totalorder %s19, 1
    %p84 = por %p82, %p83
    %p86 = scmp.ne.s32.totalorder %s71, %s85
    %p87 = scmp.eq.s32.totalorder %s19, 0
    %p88 = por %p86, %p87
    %s90 = sadd.s32 %s89, 1
    %p93 = scmp.eq.s32.totalorder %s13, 1
    %p94 = scmp.ne.s32.totalorder %s89, %s91
    %p95 = scmp.eq.s32.totalorder %s13, 0
    %p96 = por %p94, %p95
    %p97 = scmp.ne.s32.totalorder %s89, %s91
    %p98 = scmp.eq.s32.totalorder %s18, 1
    %p99 = por %p97, %p98
    %p100 = scmp.ne.s32.totalorder %s91, %s92
    %p101 = scmp.eq.s32.totalorder %s18, 0
    %p102 = por %p100, %p101
    %p103 = scmp.ne.s32.totalorder %s91, %s92
    %p104 = scmp.eq.s32.totalorder %s19, 1
    %p105 = por %p103, %p104
    %p107 = scmp.ne.s32.totalorder %s92, %s106
    %p108 = scmp.eq.s32.totalorder %s19, 0
    %p109 = por %p107, %p108
    %s111 = sadd.s32 %s110, 1
    %p114 = scmp.eq.s32.totalorder %s13, 1
    %p115 = scmp.ne.s32.totalorder %s110, %s112
    %p116 = scmp.eq.s32.totalorder %s13, 0
    %p117 = por %p115, %p116
    %p118 = scmp.ne.s32.totalorder %s110, %s112
    %p119 = scmp.eq.s32.totalorder %s18, 1
    %p120 = por %p118, %p119
    %p121 = scmp.ne.s32.totalorder %s112, %s113
    %p122 = scmp.eq.s32.totalorder %s18, 0
    %p123 = por %p121, %p122
    %p124 = scmp.ne.s32.totalorder %s112, %s113
    %p125 = scmp.eq.s32.totalorder %s19, 1
    %p126 = por %p124, %p125
    %p128 = scmp.ne.s32.totalorder %s113, %s127
    %p129 = scmp.eq.s32.totalorder %s19, 0
    %p130 = por %p128, %p129
    %s132 = sadd.s32 %s131, 1
    %p135 = scmp.eq.s32.totalorder %s13, 1
    %p136 = scmp.ne.s32.totalorder %s131, %s133
    %p137 = scmp.eq.s32.totalorder %s13, 0
    %p138 = por %p136, %p137
    %p139 = scmp.ne.s32.totalorder %s131, %s133
    %p140 = scmp.eq.s32.totalorder %s18, 1
    %p141 = por %p139, %p140
    %p142 = scmp.ne.s32.totalorder %s133, %s134
    %p143 = scmp.eq.s32.totalorder %s18, 0
    %p144 = por %p142, %p143
    %p145 = scmp.ne.s32.totalorder %s133, %s134
    %p146 = scmp.eq.s32.totalorder %s19, 1
    %p147 = por %p145, %p146
    %p149 = scmp.ne.s32.totalorder %s134, %s148
    %p150 = scmp.eq.s32.totalorder %s19, 0
    %p151 = por %p149, %p150
    %s153 = sadd.s32 %s152, 1
    %p156 = scmp.eq.s32.totalorder %s13, 1
    %p157 = scmp.ne.s32.totalorder %s152, %s154
    %p158 = scmp.eq.s32.totalorder %s13, 0
    %p159 = por %p157, %p158
    %p160 = scmp.ne.s32.totalorder %s152, %s154
    %p161 = scmp.eq.s32.totalorder %s18, 1
    %p162 = por %p160, %p161
    %p163 = scmp.ne.s32.totalorder %s154, %s155
    %p164 = scmp.eq.s32.totalorder %s18, 0
    %p165 = por %p163, %p164
    %p166 = scmp.ne.s32.totalorder %s154, %s155
    %p167 = scmp.eq.s32.totalorder %s19, 1
    %p168 = por %p166, %p167
    %p170 = scmp.ne.s32.totalorder %s155, %s169
    %p171 = scmp.eq.s32.totalorder %s19, 0
    %p172 = por %p170, %p171
    %s173 = ssub.s32 %s13, %s20
    %p174 = scmp.eq.s32.totalorder %s173, 0
    %s176 = sadd.s32 %s175, 1
    %s177 = scalar_select %p174, %s175, %s176
    %p180 = pneg %p174
    %p181 = scmp.eq.s32.totalorder %s13, 1
    %p182 = por %p180, %p181
    %p183 = scmp.ne.s32.totalorder %s175, %s178
    %p184 = scmp.eq.s32.totalorder %s13, 0
    %p185 = por %p183, %p184
    %p186 = scmp.ne.s32.totalorder %s175, %s178
    %p187 = scmp.eq.s32.totalorder %s18, 1
    %p188 = por %p186, %p187
    %p189 = scmp.ne.s32.totalorder %s178, %s179
    %p190 = scmp.eq.s32.totalorder %s18, 0
    %p191 = por %p189, %p190
    %p192 = scmp.ne.s32.totalorder %s178, %s179
    %p193 = scmp.eq.s32.totalorder %s19, 1
    %p194 = por %p192, %p193
    %p196 = scmp.ne.s32.totalorder %s179, %s195
    %p197 = scmp.eq.s32.totalorder %s19, 0
    %p198 = por %p196, %p197
    %p199 = scmp.le.s32.totalorder 1, %s13
    %p200 = scmp.lt.s32.totalorder %s13, 3
    %p201 = pnand %p199, %p200
    %p202 = pneg %p201
    // Predicated region
    $region9: #{mlp_layer_forward.1} parent=5 // pred_check
      _
    $region10: #{mlp_layer_forward.1} parent=5 // pred_check_branch
      %204 = sbr.rel (%p201) target = $region12
    $region11: #{mlp_layer_forward.1} parent=5 // pred_region
      %s205 = ssub.s32 %s13, 1
      // Predicated region
      $region13: #{mlp_layer_forward.1} parent=11 // pred_check
        %p206 = pneg %p60
      $region14: #{mlp_layer_forward.1} parent=11 // pred_check_branch
        %208 = sbr.rel (%p206) target = $region16
      $region15: #{mlp_layer_forward.1} parent=11 // pred_region
        _
      $region16: #{mlp_layer_forward.1} parent=11 // pred_fallthru
        _
      // Predicated region
      $region17: #{mlp_layer_forward.1} parent=11 // pred_check
        %p209 = pneg %p81
      $region18: #{mlp_layer_forward.1} parent=11 // pred_check_branch
        %211 = sbr.rel (%p209) target = $region20
      $region19: #{mlp_layer_forward.1} parent=11 // pred_region
        _
      $region20: #{mlp_layer_forward.1} parent=11 // pred_fallthru
        _
      // Predicated region
      $region21: #{mlp_layer_forward.1} parent=11 // pred_check
        %p212 = pneg %p102
      $region22: #{mlp_layer_forward.1} parent=11 // pred_check_branch
        %214 = sbr.rel (%p212) target = $region24
      $region23: #{mlp_layer_forward.1} parent=11 // pred_region
        _
      $region24: #{mlp_layer_forward.1} parent=11 // pred_fallthru
        _
      // Predicated region
      $region25: #{mlp_layer_forward.1} parent=11 // pred_check
        %p215 = pneg %p123
      $region26: #{mlp_layer_forward.1} parent=11 // pred_check_branch
        %217 = sbr.rel (%p215) target = $region28
      $region27: #{mlp_layer_forward.1} parent=11 // pred_region
        _
      $region28: #{mlp_layer_forward.1} parent=11 // pred_fallthru
        _
      // Predicated region
      $region29: #{mlp_layer_forward.1} parent=11 // pred_check
        %p218 = pneg %p144
      $region30: #{mlp_layer_forward.1} parent=11 // pred_check_branch
        %220 = sbr.rel (%p218) target = $region32
      $region31: #{mlp_layer_forward.1} parent=11 // pred_region
        _
      $region32: #{mlp_layer_forward.1} parent=11 // pred_fallthru
        _
      // Predicated region
      $region33: #{mlp_layer_forward.1} parent=11 // pred_check
        %p221 = pneg %p165
      $region34: #{mlp_layer_forward.1} parent=11 // pred_check_branch
        %223 = sbr.rel (%p221) target = $region36
      $region35: #{mlp_layer_forward.1} parent=11 // pred_region
        _
      $region36: #{mlp_layer_forward.1} parent=11 // pred_fallthru
        _
    $region12: #{mlp_layer_forward.1} parent=5 // pred_fallthru
      _
    %p224 = scmp.lt.s32.totalorder %s13, 2
    // Predicated region
    $region37: #{mlp_layer_forward.1} parent=5 // pred_check
      %p225 = pneg %p224
    $region38: #{mlp_layer_forward.1} parent=5 // pred_check_branch
      %227 = sbr.rel (%p225) target = $region40
    $region39: #{mlp_layer_forward.1} parent=5 // pred_region
      // Predicated region
      $region41: #{mlp_layer_forward.1} parent=39 // pred_check
        %p228 = pneg %p33
      $region42: #{mlp_layer_forward.1} parent=39 // pred_check_branch
        %230 = sbr.rel (%p228) target = $region44
      $region43: #{mlp_layer_forward.1} parent=39 // pred_region
        %p231 = scmp.lt.s32.totalorder %s13, 1
        %s232 = scalar_select %p231, %s13, 1
        %s233 = smul.addr %s232, 8
        %s234 = scalar_lea.vmem %s0, %s233
      $region44: #{mlp_layer_forward.1} parent=39 // pred_fallthru
        _
    $region40: #{mlp_layer_forward.1} parent=5 // pred_fallthru
      _
    %p235 = scmp.le.s32.totalorder 1, %s13
    %p236 = scmp.lt.s32.totalorder %s13, 3
    %p237 = pnand %p235, %p236
    %p238 = pneg %p237
    // Predicated region
    $region45: #{mlp_layer_forward.1} parent=5 // pred_check
      _
    $region46: #{mlp_layer_forward.1} parent=5 // pred_check_branch
      %240 = sbr.rel (%p237) target = $region48
    $region47: #{mlp_layer_forward.1} parent=5 // pred_region
      %s241 = ssub.s32 %s13, 1
      %p242 = scmp.lt.s32.totalorder %s18, 1
      %s243 = scalar_select %p242, %s18, 1
      %s244 = smul.addr %s243, 8
      %s245 = scalar_lea.vmem %s0, %s244
      %p246 = pneg %p39
      %p247 = pneg %p36
      %p248 = pneg %p60
      %p249 = pneg %p57
      %p250 = pneg %p81
      %p251 = pneg %p78
      %p252 = pneg %p102
      %p253 = pneg %p99
      %p254 = pneg %p123
      %p255 = pneg %p120
      %p256 = pneg %p144
      %p257 = pneg %p141
      %p258 = pneg %p165
      %p259 = pneg %p162
      %p260 = pneg %p191
      %p261 = pneg %p188
      %p262 = scmp.lt.s32.totalorder %s18, 1
      %s263 = scalar_select %p262, %s18, 1
      %s264 = smul.addr %s263, 8
      %s265 = scalar_lea.vmem %s7, %s264
      %p266 = scmp.lt.s32.totalorder %s18, 1
      %s267 = scalar_select %p266, %s18, 1
      %s268 = smul.addr %s267, 8
      %s269 = scalar_lea.vmem %s0, %s268
      %p270 = scmp.lt.s32.totalorder %s18, 1
      %s271 = scalar_select %p270, %s18, 1
      %s272 = smul.addr %s271, 8
      %s273 = scalar_lea.vmem %s7, %s272
      %v274 = vld [vmem:[%s269] sm:$0xff]
      %v275 = vpack.c.bf16 %v274, %v274
      %v276 = vld [vmem:[%s1] sm:$0xf]
      %v277 = vld [vmem:[%s1 + $0x4] sm:$0xf]
      %v278 = vld [vmem:[%s1 + $0x8] sm:$0xf]
      %v279 = vld [vmem:[%s1 + $0xc] sm:$0xf]
      %v280 = vld [vmem:[%s1 + $0x10] sm:$0xf]
      %v281 = vld [vmem:[%s1 + $0x14] sm:$0xf]
      %v282 = vld [vmem:[%s1 + $0x18] sm:$0xf]
      %v283 = vld [vmem:[%s1 + $0x1c] sm:$0xf]
      %v284 = vld [vmem:[%s1 + $0x20] sm:$0xf]
      %v285 = vld [vmem:[%s1 + $0x24] sm:$0xf]
      %v286 = vld [vmem:[%s1 + $0x28] sm:$0xf]
      %v287 = vld [vmem:[%s1 + $0x2c] sm:$0xf]
      %v288 = vld [vmem:[%s1 + $0x30] sm:$0xf]
      %v289 = vld [vmem:[%s1 + $0x34] sm:$0xf]
      %v290 = vld [vmem:[%s1 + $0x38] sm:$0xf]
      %v291 = vld [vmem:[%s1 + $0x3c] sm:$0xf]
      %v292 = vld [vmem:[%s2] sm:$0x1]
      %v294 = vperm.slane %v292, 0
      %v312 = vunpack.c.l.b16 %v276
      %v313 = vunpack.c.l.b16 %v277
      %v314 = vunpack.c.l.b16 %v278
      %v315 = vunpack.c.l.b16 %v279
      %v316 = vunpack.c.l.b16 %v280
      %v317 = vunpack.c.l.b16 %v281
      %v318 = vunpack.c.l.b16 %v282
      %v319 = vunpack.c.l.b16 %v283
      %v320 = vunpack.c.l.b16 %v284
      %v321 = vunpack.c.l.b16 %v285
      %v322 = vunpack.c.l.b16 %v286
      %v323 = vunpack.c.l.b16 %v287
      %v324 = vunpack.c.l.b16 %v288
      %v325 = vunpack.c.l.b16 %v289
      %v326 = vunpack.c.l.b16 %v290
      %v327 = vunpack.c.l.b16 %v291
      %v328 = vpack.c.b16 %v313, %v312
      %v329 = vpack.c.b16 %v315, %v314
      %v330 = vpack.c.b16 %v317, %v316
      %v331 = vpack.c.b16 %v319, %v318
      %v332 = vpack.c.b16 %v321, %v320
      %v333 = vpack.c.b16 %v323, %v322
      %v334 = vpack.c.b16 %v325, %v324
      %v335 = vpack.c.b16 %v327, %v326
      %344 = vmatpush.bf16.msra.mxu0 %v335
      %345 = vmatpush.bf16.msra.mxu0 %v334
      %346 = vmatpush.bf16.msra.mxu0 %v333
      %347 = vmatpush.bf16.msra.mxu0 %v332
      %348 = vmatpush.bf16.msra.mxu0 %v331
      %349 = vmatpush.bf16.msra.mxu0 %v330
      %350 = vmatpush.bf16.msra.mxu0 %v329
      %351 = vmatpush.bf16.msra.mxu0 %v328
      %352 = vmatmul.bf16.gmra.mxu0 %v275
      %v353 = vpop.f32.mrf.mxu0
      %v354 = vadd.f32 %v294, %v353
      %v355 = vpop.f32.mrf.mxu0
      %356 = vdwg.mxu0
      %v357 = vmul.f32 %v354, 0.5
      %v358 = vmul.f32 %v354, 0.044715
      %v359 = vmul.f32 %v358, %v354
      %v360 = vmul.f32 %v359, %v354
      %v361 = vadd.f32 %v354, %v360
      %v362 = vmul.f32 %v361, 0.7978846
      %v363 = vtanh.pop %v362
      %v364 = vadd.f32 %v363, 1.0
      %v365 = vmul.f32 %v357, %v364
      %v366 = vpack.c.bf16 %v365, %v365
      %v367 = vld [vmem:[%s3] sm:$0xf]
      %v368 = vld [vmem:[%s3 + $0x4] sm:$0xf]
      %v369 = vld [vmem:[%s3 + $0x8] sm:$0xf]
      %v370 = vld [vmem:[%s3 + $0xc] sm:$0xf]
      %v371 = vld [vmem:[%s3 + $0x10] sm:$0xf]
      %v372 = vld [vmem:[%s3 + $0x14] sm:$0xf]
      %v373 = vld [vmem:[%s3 + $0x18] sm:$0xf]
      %v374 = vld [vmem:[%s3 + $0x1c] sm:$0xf]
      %v375 = vld [vmem:[%s3 + $0x20] sm:$0xf]
      %v376 = vld [vmem:[%s3 + $0x24] sm:$0xf]
      %v377 = vld [vmem:[%s3 + $0x28] sm:$0xf]
      %v378 = vld [vmem:[%s3 + $0x2c] sm:$0xf]
      %v379 = vld [vmem:[%s3 + $0x30] sm:$0xf]
      %v380 = vld [vmem:[%s3 + $0x34] sm:$0xf]
      %v381 = vld [vmem:[%s3 + $0x38] sm:$0xf]
      %v382 = vld [vmem:[%s3 + $0x3c] sm:$0xf]
      %v383 = vld [vmem:[%s4] sm:$0x1]
      %v385 = vperm.slane %v383, 0
      %v403 = vunpack.c.l.b16 %v367
      %v404 = vunpack.c.l.b16 %v368
      %v405 = vunpack.c.l.b16 %v369
      %v406 = vunpack.c.l.b16 %v370
      %v407 = vunpack.c.l.b16 %v371
      %v408 = vunpack.c.l.b16 %v372
      %v409 = vunpack.c.l.b16 %v373
      %v410 = vunpack.c.l.b16 %v374
      %v411 = vunpack.c.l.b16 %v375
      %v412 = vunpack.c.l.b16 %v376
      %v413 = vunpack.c.l.b16 %v377
      %v414 = vunpack.c.l.b16 %v378
      %v415 = vunpack.c.l.b16 %v379
      %v416 = vunpack.c.l.b16 %v380
      %v417 = vunpack.c.l.b16 %v381
      %v418 = vunpack.c.l.b16 %v382
      %v419 = vpack.c.b16 %v404, %v403
      %v420 = vpack.c.b16 %v406, %v405
      %v421 = vpack.c.b16 %v408, %v407
      %v422 = vpack.c.b16 %v410, %v409
      %v423 = vpack.c.b16 %v412, %v411
      %v424 = vpack.c.b16 %v414, %v413
      %v425 = vpack.c.b16 %v416, %v415
      %v426 = vpack.c.b16 %v418, %v417
      %435 = vmatpush.bf16.msra.mxu0 %v426
      %436 = vmatpush.bf16.msra.mxu0 %v425
      %437 = vmatpush.bf16.msra.mxu0 %v424
      %438 = vmatpush.bf16.msra.mxu0 %v423
      %439 = vmatpush.bf16.msra.mxu0 %v422
      %440 = vmatpush.bf16.msra.mxu0 %v421
      %441 = vmatpush.bf16.msra.mxu0 %v420
      %442 = vmatpush.bf16.msra.mxu0 %v419
      %443 = vmatmul.bf16.gmra.mxu0 %v366
      %v444 = vpop.f32.mrf.mxu0
      %v445 = vadd.f32 %v385, %v444
      %v446 = vpop.f32.mrf.mxu0
      %447 = vdwg.mxu0
      %v448 = vmul.f32 %v445, 0.5
      %v449 = vmul.f32 %v445, 0.044715
      %v450 = vmul.f32 %v449, %v445
      %v451 = vmul.f32 %v450, %v445
      %v452 = vadd.f32 %v445, %v451
      %v453 = vmul.f32 %v452, 0.7978846
      %v454 = vtanh.pop %v453
      %v455 = vadd.f32 %v454, 1.0
      %v456 = vmul.f32 %v448, %v455
      %v457 = vpack.c.bf16 %v456, %v456
      %v458 = vld [vmem:[%s5] sm:$0xf]
      %v459 = vld [vmem:[%s5 + $0x4] sm:$0xf]
      %v460 = vld [vmem:[%s5 + $0x8] sm:$0xf]
      %v461 = vld [vmem:[%s5 + $0xc] sm:$0xf]
      %v462 = vld [vmem:[%s5 + $0x10] sm:$0xf]
      %v463 = vld [vmem:[%s5 + $0x14] sm:$0xf]
      %v464 = vld [vmem:[%s5 + $0x18] sm:$0xf]
      %v465 = vld [vmem:[%s5 + $0x1c] sm:$0xf]
      %v466 = vld [vmem:[%s5 + $0x20] sm:$0xf]
      %v467 = vld [vmem:[%s5 + $0x24] sm:$0xf]
      %v468 = vld [vmem:[%s5 + $0x28] sm:$0xf]
      %v469 = vld [vmem:[%s5 + $0x2c] sm:$0xf]
      %v470 = vld [vmem:[%s5 + $0x30] sm:$0xf]
      %v471 = vld [vmem:[%s5 + $0x34] sm:$0xf]
      %v472 = vld [vmem:[%s5 + $0x38] sm:$0xf]
      %v473 = vld [vmem:[%s5 + $0x3c] sm:$0xf]
      %v474 = vld [vmem:[%s6] sm:$0x1]
      %v476 = vperm.slane %v474, 0
      %v494 = vunpack.c.l.b16 %v458
      %v495 = vunpack.c.l.b16 %v459
      %v496 = vunpack.c.l.b16 %v460
      %v497 = vunpack.c.l.b16 %v461
      %v498 = vunpack.c.l.b16 %v462
      %v499 = vunpack.c.l.b16 %v463
      %v500 = vunpack.c.l.b16 %v464
      %v501 = vunpack.c.l.b16 %v465
      %v502 = vunpack.c.l.b16 %v466
      %v503 = vunpack.c.l.b16 %v467
      %v504 = vunpack.c.l.b16 %v468
      %v505 = vunpack.c.l.b16 %v469
      %v506 = vunpack.c.l.b16 %v470
      %v507 = vunpack.c.l.b16 %v471
      %v508 = vunpack.c.l.b16 %v472
      %v509 = vunpack.c.l.b16 %v473
      %v510 = vpack.c.b16 %v495, %v494
      %v511 = vpack.c.b16 %v497, %v496
      %v512 = vpack.c.b16 %v499, %v498
      %v513 = vpack.c.b16 %v501, %v500
      %v514 = vpack.c.b16 %v503, %v502
      %v515 = vpack.c.b16 %v505, %v504
      %v516 = vpack.c.b16 %v507, %v506
      %v517 = vpack.c.b16 %v509, %v508
      %526 = vmatpush.bf16.msra.mxu0 %v517
      %527 = vmatpush.bf16.msra.mxu0 %v516
      %528 = vmatpush.bf16.msra.mxu0 %v515
      %529 = vmatpush.bf16.msra.mxu0 %v514
      %530 = vmatpush.bf16.msra.mxu0 %v513
      %531 = vmatpush.bf16.msra.mxu0 %v512
      %532 = vmatpush.bf16.msra.mxu0 %v511
      %533 = vmatpush.bf16.msra.mxu0 %v510
      %534 = vmatmul.bf16.gmra.mxu0 %v457
      %v535 = vpop.f32.mrf.mxu0
      %v536 = vadd.f32 %v476, %v535
      %v537 = vpop.f32.mrf.mxu0
      %538 = vdwg.mxu0
      %v539 = vmax.f32 %v536, 0.0
      %v540 = vadd.f32 %v274, %v539
      %541 = vst [vmem:[%s273] sm:$0xff] %v540
      %p542 = scmp.lt.s32.totalorder %s18, 1
      %s543 = scalar_select %p542, %s18, 1
      %s544 = smul.addr %s543, 8
      %s545 = scalar_lea.vmem %s7, %s544
      // Predicated region
      $region49: #{mlp_layer_forward.1} parent=47 // pred_check
        %p546 = pneg %p188
      $region50: #{mlp_layer_forward.1} parent=47 // pred_check_branch
        %548 = sbr.rel (%p546) target = $region52
      $region51: #{mlp_layer_forward.1} parent=47 // pred_region
        _
      $region52: #{mlp_layer_forward.1} parent=47 // pred_fallthru
        _
    $region48: #{mlp_layer_forward.1} parent=5 // pred_fallthru
      _
    %p549 = scmp.le.s32.totalorder 2, %s13
    // Predicated region
    $region53: #{mlp_layer_forward.1} parent=5 // pred_check
      %p550 = pneg %p549
    $region54: #{mlp_layer_forward.1} parent=5 // pred_check_branch
      %552 = sbr.rel (%p550) target = $region56
    $region55: #{mlp_layer_forward.1} parent=5 // pred_region
      %s553 = ssub.s32 %s13, 2
      // Predicated region
      $region57: #{mlp_layer_forward.1} parent=55 // pred_check
        %p554 = pneg %p194
      $region58: #{mlp_layer_forward.1} parent=55 // pred_check_branch
        %556 = sbr.rel (%p554) target = $region60
      $region59: #{mlp_layer_forward.1} parent=55 // pred_region
        %p557 = scmp.lt.s32.totalorder %s19, 1
        %s558 = scalar_select %p557, %s19, 1
        %s559 = smul.addr %s558, 8
        %s560 = scalar_lea.vmem %s7, %s559
      $region60: #{mlp_layer_forward.1} parent=55 // pred_fallthru
        _
    $region56: #{mlp_layer_forward.1} parent=5 // pred_fallthru
      _
  $region6: #{mlp_layer_forward.1} parent=0 // loop_footer
    %s17 = sadd.s32 1, %s13
  $region7: #{mlp_layer_forward.1} parent=0 // loop_footer_branch
    %12 = sbr.rel target = $region3
  $region8: #{mlp_layer_forward.1} parent=0 // loop_exit
    _

</llo_original>
